<compile_context>
chip_gen: v6e
topology: v6e:2x2x1
jax: 0.10.0
libtpu: 0.0.40
codegen_flags: <defaults>
</compile_context>

<pallas_src>
import jax
import jax.numpy as jnp
from jax import lax
from jax.experimental import pallas as pl
from jax.experimental.pallas import tpu as pltpu

DIS_DIM = 256          # self.disDim
FEATURE_SIZE = 32      # dataset_train_object.featureSize (synthetic, small)


def _round_up(x, m):
    return ((x + m - 1) // m) * m


def _disc_kernel(x_ref, w1_ref, w2_ref, w3_ref, bias_ref, b4_ref, o_ref):
    """One batch tile of the 4-layer MLP; writes a lane-dense (1, TM) row."""
    x = x_ref[...]                                           # (TM, F) compute dtype

    b1 = bias_ref[0:1, :]                                    # (1, 256) f32
    b2 = bias_ref[1:2, :]
    b3 = bias_ref[2:3, :]
    w4 = bias_ref[3:4, :]                                    # (1, 256) f32 (w4^T)

    # Linear(F_in, 256) + ReLU   (f32 accumulation, f32 bias/ReLU)
    h = jnp.dot(x, w1_ref[...], preferred_element_type=jnp.float32) + b1
    h = jnp.maximum(h, 0.0).astype(w2_ref.dtype)
    # Linear(256, 256) + ReLU
    h = jnp.dot(h, w2_ref[...], preferred_element_type=jnp.float32) + b2
    h = jnp.maximum(h, 0.0).astype(w3_ref.dtype)
    # Linear(256, 256) + ReLU
    h = jnp.dot(h, w3_ref[...], preferred_element_type=jnp.float32) + b3
    h = jnp.maximum(h, 0.0)                                  # (TM, 256) f32

    # Linear(256, 1) emitted lane-densely: contract w4 (1,256) with h (TM,256)
    # on the feature axis (A @ B^T form) -> (1, TM) row, lanes fully used.
    row = lax.dot_general(w4, h,
                          dimension_numbers=(((1,), (1,)), ((), ())),
                          preferred_element_type=jnp.float32)  # (1, TM)
    o_ref[0] = (row + b4_ref[0]).astype(o_ref.dtype)         # o_ref block (1,1,TM)


def discriminator_forward(x, params, *, minibatch_averaging=False,
                          block_m=1024, use_bf16=True, core_parallel=None):
    """x: (B, FEATURE_SIZE) float32 -> (B, 1) float32.

    block_m:       batch tile (rounded to a multiple of 128; 1024-2048 is a
                   good default on all generations).
    use_bf16:      feed bf16 activations/weights to the MXU (f32 accumulation,
                   f32 biases/ReLU/output).  Recommended on v5e/v6e/v7x; set
                   False only if bit-exact f32 vs. the reference is required.
    core_parallel: None = auto (CORE_PARALLEL on v7x, "parallel" elsewhere);
                   True/False to force.
    """
    B, F = x.shape
    w1, b1, w2, b2, w3, b3, w4, b4 = params

    # --- fold minibatch averaging into an effective first-layer bias ---------
    if minibatch_averaging:
        # cat([x, mean(x,0)]) @ w1 == x @ w1[:F] + mean @ w1[F:]
        x_mean = jnp.mean(x, axis=0, keepdims=True)          # global mean, pre-pad
        w1_x = w1[:F, :]
        b1_eff = b1 + x_mean @ w1[F:, :]                     # (1, 256) f32
    else:
        w1_x = w1
        b1_eff = b1

    # --- coalesce small operands: [b1_eff; b2; b3; w4^T] -> one (4,256) array -
    bias_pack = jnp.concatenate([b1_eff, b2, b3, w4.T], axis=0).astype(jnp.float32)
    b4_s = jnp.reshape(b4, (1,)).astype(jnp.float32)         # scalar via SMEM

    # --- batch tiling ---------------------------------------------------------
    TM = _round_up(min(block_m, max(B, 1)), 128)
    Bp = _round_up(B, TM)
    num_tiles = Bp // TM
    if Bp != B:
        x = jnp.pad(x, ((0, Bp - B), (0, 0)))
    grid = (num_tiles,)

    compute_dtype = jnp.bfloat16 if use_bf16 else jnp.float32
    x_c = x.astype(compute_dtype)
    w1_c = w1_x.astype(compute_dtype)
    w2_c = w2.astype(compute_dtype)
    w3_c = w3.astype(compute_dtype)
    Fin = w1_c.shape[0]

    itemsize = 2 if use_bf16 else 4
    flops = 2 * Bp * (Fin * DIS_DIM + 2 * DIS_DIM * DIS_DIM + DIS_DIM)
    bytes_accessed = (
        Bp * Fin * itemsize                                   # x
        + (Fin * DIS_DIM + 2 * DIS_DIM * DIS_DIM) * itemsize  # w1..w3
        + 4 * DIS_DIM * 4 + 4                                 # bias pack + b4
        + Bp * 4                                              # packed output
    )
    cost = pl.CostEstimate(flops=flops, transcendentals=0,
                           bytes_accessed=bytes_accessed)

    # --- batch-axis semantics: both TensorCores on v7x ------------------------
    if core_parallel is None:
        try:
            kind = jax.devices()[0].device_kind.lower()
            core_parallel = ("v7" in kind) or ("tpu7" in kind)
        except Exception:
            core_parallel = False
    if core_parallel and num_tiles > 1:
        batch_sem = (pltpu.CORE_PARALLEL,)
    else:
        batch_sem = ("parallel",)

    out = pl.pallas_call(
        _disc_kernel,
        out_shape=jax.ShapeDtypeStruct((num_tiles, 1, TM), jnp.float32),
        grid=grid,
        in_specs=[
            pl.BlockSpec((TM, Fin), lambda i: (i, 0)),            # x (pipelined)
            pl.BlockSpec((Fin, DIS_DIM), lambda i: (0, 0)),       # w1 (VMEM-resident)
            pl.BlockSpec((DIS_DIM, DIS_DIM), lambda i: (0, 0)),   # w2
            pl.BlockSpec((DIS_DIM, DIS_DIM), lambda i: (0, 0)),   # w3
            pl.BlockSpec((4, DIS_DIM), lambda i: (0, 0)),         # bias pack
            pl.BlockSpec(memory_space=pltpu.MemorySpace.SMEM),    # b4 scalar
        ],
        out_specs=pl.BlockSpec((1, 1, TM), lambda i: (i, 0, 0)),  # packed scores
        compiler_params=pltpu.CompilerParams(dimension_semantics=batch_sem),
        cost_estimate=cost,
    )(x_c, w1_c, w2_c, w3_c, bias_pack, b4_s)

    # (num_tiles, 1, TM) -> (Bp, 1) -> (B, 1)
    return out.reshape(Bp, 1)[:B]


def init_params(key, *, minibatch_averaging=False):
    """Deterministic PyTorch-style U(-1/sqrt(fan_in), 1/sqrt(fan_in)) init."""
    ma_coef = 2 if minibatch_averaging else 1
    in_dim = ma_coef * FEATURE_SIZE
    dims = [(in_dim, DIS_DIM), (DIS_DIM, DIS_DIM), (DIS_DIM, DIS_DIM), (DIS_DIM, 1)]
    params = []
    for (fan_in, fan_out) in dims:
        key, kw, kb = jax.random.split(key, 3)
        bound = 1.0 / jnp.sqrt(jnp.float32(fan_in))
        w = jax.random.uniform(kw, (fan_in, fan_out), jnp.float32, -bound, bound)
        b = jax.random.uniform(kb, (1, fan_out), jnp.float32, -bound, bound)
        params += [w, b]
    return tuple(params)


def discriminator_reference(x, params, *, minibatch_averaging=False):
    """Plain-JAX reference matching the PyTorch forward."""
    w1, b1, w2, b2, w3, b3, w4, b4 = params
    if minibatch_averaging:
        x_mean = jnp.broadcast_to(jnp.mean(x, axis=0, keepdims=True), x.shape)
        x = jnp.concatenate([x, x_mean], axis=1)
    h = jnp.maximum(x @ w1 + b1, 0.0)
    h = jnp.maximum(h @ w2 + b2, 0.0)
    h = jnp.maximum(h @ w3 + b3, 0.0)
    return h @ w4 + b4


if __name__ == "__main__":
    key = jax.random.PRNGKey(0)
    kx, kp1, kp2 = jax.random.split(key, 3)

    B = 4
    x = jax.random.normal(kx, (B, FEATURE_SIZE), jnp.float32)

    # --- opt.minibatch_averaging = False, exact f32 path ----------------------
    params = init_params(kp1, minibatch_averaging=False)
    out = discriminator_forward(x, params, minibatch_averaging=False,
                                use_bf16=False)
    out = jax.block_until_ready(out)
    ref = discriminator_reference(x, params, minibatch_averaging=False)
    assert out.shape == (B, 1)
    assert jnp.allclose(out, ref, atol=1e-5, rtol=1e-5)

    # --- opt.minibatch_averaging = True, exact f32 path -----------------------
    params_ma = init_params(kp2, minibatch_averaging=True)
    out_ma = discriminator_forward(x, params_ma, minibatch_averaging=True,
                                   use_bf16=False)
    out_ma = jax.block_until_ready(out_ma)
    ref_ma = discriminator_reference(x, params_ma, minibatch_averaging=True)
    assert out_ma.shape == (B, 1)
    assert jnp.allclose(out_ma, ref_ma, atol=1e-5, rtol=1e-5)

    # --- default bf16 MXU path (relaxed tolerance vs f32 reference) -----------
    out_bf16 = discriminator_forward(x, params, minibatch_averaging=False)
    out_bf16 = jax.block_until_ready(out_bf16)
    assert out_bf16.shape == (B, 1)
    assert jnp.allclose(out_bf16, ref, atol=1e-1, rtol=1e-1)

    # --- larger batch: multiple tiles + padded rows, f32 for strict check -----
    B2 = 2500
    x2 = jax.random.normal(kx, (B2, FEATURE_SIZE), jnp.float32)
    out2 = discriminator_forward(x2, params_ma, minibatch_averaging=True,
                                 block_m=1024, use_bf16=False)
    out2 = jax.block_until_ready(out2)
    ref2 = discriminator_reference(x2, params_ma, minibatch_averaging=True)
    assert out2.shape == (B2, 1)
    assert jnp.allclose(out2, ref2, atol=1e-4, rtol=1e-4)

    print("KERNEL_OK")
</pallas_src>

<mosaic_0001>
module attributes {stable_mosaic.version = 11 : i64} {
  func.func @_disc_kernel(%arg0: i32, %arg1: memref<128x32xf32, #tpu.memory_space<vmem>>, %arg2: memref<32x256xf32, #tpu.memory_space<vmem>>, %arg3: memref<256x256xf32, #tpu.memory_space<vmem>>, %arg4: memref<256x256xf32, #tpu.memory_space<vmem>>, %arg5: memref<4x256xf32, #tpu.memory_space<vmem>>, %arg6: memref<1xf32, #tpu.memory_space<smem>>, %arg7: memref<1x1x128xf32, #tpu.memory_space<vmem>>) attributes {dimension_semantics = [#tpu.dimension_semantics<parallel>], iteration_bounds = array<i64: 1>, scalar_prefetch = 0 : i64, scratch_operands = 0 : i64, tpu.core_type = #tpu.core_type<tc>, window_params = [{transform_indices = @transform_0, window_bounds = array<i64: 128, 32>}, {pipeline_mode = #tpu.pipeline_mode<synchronous>, transform_indices = @transform_1, window_bounds = array<i64: 32, 256>}, {pipeline_mode = #tpu.pipeline_mode<synchronous>, transform_indices = @transform_2, window_bounds = array<i64: 256, 256>}, {pipeline_mode = #tpu.pipeline_mode<synchronous>, transform_indices = @transform_3, window_bounds = array<i64: 256, 256>}, {pipeline_mode = #tpu.pipeline_mode<synchronous>, transform_indices = @transform_4, window_bounds = array<i64: 4, 256>}, {transform_indices = @transform_5, window_bounds = array<i64: 1>}, {transform_indices = @transform_6, window_bounds = array<i64: 1, 1, 128>}]} {
    %c0 = arith.constant 0 : index
    %c0_0 = arith.constant 0 : index
    %0 = vector.load %arg1[%c0, %c0_0] : memref<128x32xf32, #tpu.memory_space<vmem>>, vector<128x32xf32>
    %c0_1 = arith.constant 0 : index
    %c0_2 = arith.constant 0 : index
    %1 = vector.load %arg5[%c0_1, %c0_2] : memref<4x256xf32, #tpu.memory_space<vmem>>, vector<1x256xf32>
    %c1 = arith.constant 1 : index
    %c0_3 = arith.constant 0 : index
    %2 = vector.load %arg5[%c1, %c0_3] : memref<4x256xf32, #tpu.memory_space<vmem>>, vector<1x256xf32>
    %c2 = arith.constant 2 : index
    %c0_4 = arith.constant 0 : index
    %3 = vector.load %arg5[%c2, %c0_4] : memref<4x256xf32, #tpu.memory_space<vmem>>, vector<1x256xf32>
    %c3 = arith.constant 3 : index
    %c0_5 = arith.constant 0 : index
    %4 = vector.load %arg5[%c3, %c0_5] : memref<4x256xf32, #tpu.memory_space<vmem>>, vector<1x256xf32>
    %c0_6 = arith.constant 0 : index
    %c0_7 = arith.constant 0 : index
    %5 = vector.load %arg2[%c0_6, %c0_7] : memref<32x256xf32, #tpu.memory_space<vmem>>, vector<32x256xf32>
    %cst = arith.constant dense<0.000000e+00> : vector<128x256xf32>
    %6 = tpu.matmul %0, %5, %cst {dimension_numbers = #tpu.dot_dimension_numbers<[1], [0], [0], [1], [0, 0, 1, 1], [], []>} : vector<128x32xf32>, vector<32x256xf32>, vector<128x256xf32> -> vector<128x256xf32>
    %7 = vector.broadcast %1 : vector<1x256xf32> to vector<128x256xf32>
    %8 = arith.addf %6, %7 : vector<128x256xf32>
    %cst_8 = arith.constant 0.000000e+00 : f32
    %9 = vector.broadcast %cst_8 : f32 to vector<128x256xf32>
    %10 = arith.maximumf %8, %9 : vector<128x256xf32>
    %c0_9 = arith.constant 0 : index
    %c0_10 = arith.constant 0 : index
    %11 = vector.load %arg3[%c0_9, %c0_10] : memref<256x256xf32, #tpu.memory_space<vmem>>, vector<256x256xf32>
    %cst_11 = arith.constant dense<0.000000e+00> : vector<128x256xf32>
    %12 = tpu.matmul %10, %11, %cst_11 {dimension_numbers = #tpu.dot_dimension_numbers<[1], [0], [0], [1], [0, 0, 1, 1], [], []>} : vector<128x256xf32>, vector<256x256xf32>, vector<128x256xf32> -> vector<128x256xf32>
    %13 = vector.broadcast %2 : vector<1x256xf32> to vector<128x256xf32>
    %14 = arith.addf %12, %13 : vector<128x256xf32>
    %cst_12 = arith.constant 0.000000e+00 : f32
    %15 = vector.broadcast %cst_12 : f32 to vector<128x256xf32>
    %16 = arith.maximumf %14, %15 : vector<128x256xf32>
    %c0_13 = arith.constant 0 : index
    %c0_14 = arith.constant 0 : index
    %17 = vector.load %arg4[%c0_13, %c0_14] : memref<256x256xf32, #tpu.memory_space<vmem>>, vector<256x256xf32>
    %cst_15 = arith.constant dense<0.000000e+00> : vector<128x256xf32>
    %18 = tpu.matmul %16, %17, %cst_15 {dimension_numbers = #tpu.dot_dimension_numbers<[1], [0], [0], [1], [0, 0, 1, 1], [], []>} : vector<128x256xf32>, vector<256x256xf32>, vector<128x256xf32> -> vector<128x256xf32>
    %19 = vector.broadcast %3 : vector<1x256xf32> to vector<128x256xf32>
    %20 = arith.addf %18, %19 : vector<128x256xf32>
    %cst_16 = arith.constant 0.000000e+00 : f32
    %21 = vector.broadcast %cst_16 : f32 to vector<128x256xf32>
    %22 = arith.maximumf %20, %21 : vector<128x256xf32>
    %cst_17 = arith.constant dense<0.000000e+00> : vector<1x128xf32>
    %23 = tpu.matmul %4, %22, %cst_17 {dimension_numbers = #tpu.dot_dimension_numbers<[1], [1], [0], [0], [0, 0, 1, 0], [], []>} : vector<1x256xf32>, vector<128x256xf32>, vector<1x128xf32> -> vector<1x128xf32>
    %c0_18 = arith.constant 0 : index
    %24 = memref.load %arg6[%c0_18] : memref<1xf32, #tpu.memory_space<smem>>
    %25 = vector.broadcast %24 : f32 to vector<1x128xf32>
    %26 = arith.addf %23, %25 : vector<1x128xf32>
    %c0_19 = arith.constant 0 : index
    %c0_20 = arith.constant 0 : index
    %c0_21 = arith.constant 0 : index
    %27 = vector.load %arg7[%c0_19, %c0_20, %c0_21] : memref<1x1x128xf32, #tpu.memory_space<vmem>>, vector<1x1x128xf32>
    %28 = vector.shape_cast %27 : vector<1x1x128xf32> to vector<1x128xf32>
    %29 = vector.shape_cast %26 : vector<1x128xf32> to vector<1x1x128xf32>
    tpu.vector_store %arg7[%c0_19, %c0_20, %c0_21], %29 {strides = array<i32>} : memref<1x1x128xf32, #tpu.memory_space<vmem>>, vector<1x1x128xf32>,
    return
  }
  func.func @transform_0(%arg0: i32) -> (i32, i32) {
    %c0_i32 = arith.constant 0 : i32
    %c0_i32_0 = arith.constant 0 : i32
    return %arg0, %c0_i32 : i32, i32
  }
  func.func @transform_1(%arg0: i32) -> (i32, i32) {
    %c0_i32 = arith.constant 0 : i32
    %c0_i32_0 = arith.constant 0 : i32
    %c0_i32_1 = arith.constant 0 : i32
    return %c0_i32, %c0_i32_0 : i32, i32
  }
  func.func @transform_2(%arg0: i32) -> (i32, i32) {
    %c0_i32 = arith.constant 0 : i32
    %c0_i32_0 = arith.constant 0 : i32
    %c0_i32_1 = arith.constant 0 : i32
    return %c0_i32, %c0_i32_0 : i32, i32
  }
  func.func @transform_3(%arg0: i32) -> (i32, i32) {
    %c0_i32 = arith.constant 0 : i32
    %c0_i32_0 = arith.constant 0 : i32
    %c0_i32_1 = arith.constant 0 : i32
    return %c0_i32, %c0_i32_0 : i32, i32
  }
  func.func @transform_4(%arg0: i32) -> (i32, i32) {
    %c0_i32 = arith.constant 0 : i32
    %c0_i32_0 = arith.constant 0 : i32
    %c0_i32_1 = arith.constant 0 : i32
    return %c0_i32, %c0_i32_0 : i32, i32
  }
  func.func @transform_5(%arg0: i32) -> i32 {
    %c0_i32 = arith.constant 0 : i32
    %c0_i32_0 = arith.constant 0 : i32
    return %c0_i32 : i32
  }
  func.func @transform_6(%arg0: i32) -> (i32, i32, i32) {
    %c0_i32 = arith.constant 0 : i32
    %c0_i32_0 = arith.constant 0 : i32
    %c0_i32_1 = arith.constant 0 : i32
    return %arg0, %c0_i32, %c0_i32_0 : i32, i32, i32
  }
}

</mosaic_0001>

<llo_original>
// kernel: tpu_custom_call.1
$region0: #{tpu_custom_call.1}
  #allocation0 [shape = 'u32[]', space=smem, size = 0x4, offset = 0x4, fixed_abs, tag = 'smem constant byte address 0x4 - core index']
  #allocation1 [shape = 'u32[144,128]{1,0:T(1,128)}', space=vmem, size = 0x12000, scoped, tag = 'internal scratch']
  #allocation2 [shape = 'f32[1]{0:T(128)S(6)}', space=smem, size = 0x200, scoped, tag = 'scoped memory for tpu_custom_call.1']
  %s0 = inlined_call_operand.vmem [shape: f32[128,32], index: 0, kind: input, shape index: {}]
  %s1 = inlined_call_operand.vmem [shape: f32[32,256], index: 1, kind: input, shape index: {}]
  %s2 = inlined_call_operand.hbm [shape: f32[256,256], index: 2, kind: input, shape index: {}]
  %s3 = inlined_call_operand.hbm [shape: f32[256,256], index: 3, kind: input, shape index: {}]
  %s4 = inlined_call_operand.vmem [shape: f32[4,256], index: 4, kind: input, shape index: {}]
  %s5 = inlined_call_operand.<no memory space> [shape: f32[1], index: 5, kind: input, shape index: {}]
  %s6 = inlined_call_operand.hbm [shape: f32[1,1,128], index: 6, kind: output, shape index: {}]
  %s7 = sld [smem:[#allocation0]]
  $region42: #{tpu_custom_call.1} parent=0
    _
  %s9 = ssub.s32 1, %s7
  %s10 = scalar_select 0, %s9, %s7
  %11 = sst [smem:[#allocation2]] %s5
  $region1: #{tpu_custom_call.1} parent=0
    #allocation3 [shape = 'u8[262144]{0}', space=vmem, size = 0x40000, scoped, tag = 'input window, operand 2, single buffered']
    #allocation4 [shape = 's32[1]{0}', space=sflag, size = 0x4, scoped, tag = 'scoped memory for tpu_custom_call.1']
    #allocation5 [shape = 's32[1]{0}', space=sflag, size = 0x4, scoped, tag = 'scoped memory for tpu_custom_call.1']
    #allocation6 [shape = 'u8[262144]{0}', space=vmem, size = 0x40000, scoped, tag = 'input window, operand 3, single buffered']
    #allocation7 [shape = 's32[1]{0}', space=sflag, size = 0x4, scoped, tag = 'scoped memory for tpu_custom_call.1']
    #allocation8 [shape = 'u8[512]{0}', space=vmem, size = 0x400, scoped, tag = 'output window, operand 0, single buffered']
    %12 = vsyncpa [#allocation4], 0
    %13 = vsyncpa [#allocation7], 0
    %14 = vsyncpa [#allocation5], 0
    // Predicated region
    $region2: #{tpu_custom_call.1} parent=1 // pred_check
      _
    $region3: #{tpu_custom_call.1} parent=1 // pred_check_branch
      %16 = sbr.rel (0) target = $region5
    $region4: #{tpu_custom_call.1} parent=1 // pred_region
      _
    $region5: #{tpu_custom_call.1} parent=1 // pred_fallthru
      _
    // Predicated region
    $region6: #{tpu_custom_call.1} parent=1 // pred_check
      _
    $region7: #{tpu_custom_call.1} parent=1 // pred_check_branch
      %18 = sbr.rel (0) target = $region9
    $region8: #{tpu_custom_call.1} parent=1 // pred_region
      _
    $region9: #{tpu_custom_call.1} parent=1 // pred_fallthru
      _
    // Predicated region
    $region10: #{tpu_custom_call.1} parent=1 // pred_check
      _
    $region11: #{tpu_custom_call.1} parent=1 // pred_check_branch
      %20 = sbr.rel (0) target = $region13
    $region12: #{tpu_custom_call.1} parent=1 // pred_region
      %s22 = ssub.s32 8192, 8192
      %23 = vsyncadd [#allocation4], %s22
      %s24 = sshll.u32 [#allocation3], 4
      %s25 = int_to_ptr.vmem [resolvable:$true] %s24
      %30 = dma.hbm_to_vmem [thread:$0]  %s2, 8192, %s25, [#allocation4], 256, 256, 16
    $region13: #{tpu_custom_call.1} parent=1 // pred_fallthru
      _
    // Predicated region
    $region14: #{tpu_custom_call.1} parent=1 // pred_check
      _
    $region15: #{tpu_custom_call.1} parent=1 // pred_check_branch
      %32 = sbr.rel (0) target = $region17
    $region16: #{tpu_custom_call.1} parent=1 // pred_region
      %s34 = ssub.s32 8192, 8192
      %35 = vsyncadd [#allocation7], %s34
      %s36 = sshll.u32 [#allocation6], 4
      %s37 = int_to_ptr.vmem [resolvable:$true] %s36
      %42 = dma.hbm_to_vmem [thread:$0]  %s3, 8192, %s37, [#allocation7], 256, 256, 16
    $region17: #{tpu_custom_call.1} parent=1 // pred_fallthru
      _
    // Predicated region
    $region18: #{tpu_custom_call.1} parent=1 // pred_check
      _
    $region19: #{tpu_custom_call.1} parent=1 // pred_check_branch
      %44 = sbr.rel (0) target = $region21
    $region20: #{tpu_custom_call.1} parent=1 // pred_region
      _
    $region21: #{tpu_custom_call.1} parent=1 // pred_fallthru
      _
    // Predicated region
    $region22: #{tpu_custom_call.1} parent=1 // pred_check
      _
    $region23: #{tpu_custom_call.1} parent=1 // pred_check_branch
      %46 = sbr.rel (0) target = $region25
    $region24: #{tpu_custom_call.1} parent=1 // pred_region
      _
    $region25: #{tpu_custom_call.1} parent=1 // pred_fallthru
      _
    // Predicated region
    $region26: #{tpu_custom_call.1} parent=1 // pred_check
      _
    $region27: #{tpu_custom_call.1} parent=1 // pred_check_branch
      %48 = sbr.rel (0) target = $region29
    $region28: #{tpu_custom_call.1} parent=1 // pred_region
      %49 = dma.done [#allocation4], 8192
    $region29: #{tpu_custom_call.1} parent=1 // pred_fallthru
      _
    // Predicated region
    $region30: #{tpu_custom_call.1} parent=1 // pred_check
      _
    $region31: #{tpu_custom_call.1} parent=1 // pred_check_branch
      %51 = sbr.rel (0) target = $region33
    $region32: #{tpu_custom_call.1} parent=1 // pred_region
      %52 = dma.done [#allocation7], 8192
    $region33: #{tpu_custom_call.1} parent=1 // pred_fallthru
      _
    %v53 = vld [vmem:[%s0] sm:$0xff]
    %v54 = vld [vmem:[%s0 + $0x8] sm:$0xff]
    %v55 = vld [vmem:[%s0 + $0x10] sm:$0xff]
    %v56 = vld [vmem:[%s0 + $0x18] sm:$0xff]
    %v57 = vld [vmem:[%s0 + $0x20] sm:$0xff]
    %v58 = vld [vmem:[%s0 + $0x28] sm:$0xff]
    %v59 = vld [vmem:[%s0 + $0x30] sm:$0xff]
    %v60 = vld [vmem:[%s0 + $0x38] sm:$0xff]
    %v61 = vld [vmem:[%s0 + $0x40] sm:$0xff]
    %v62 = vld [vmem:[%s0 + $0x48] sm:$0xff]
    %v63 = vld [vmem:[%s0 + $0x50] sm:$0xff]
    %v64 = vld [vmem:[%s0 + $0x58] sm:$0xff]
    %v65 = vld [vmem:[%s0 + $0x60] sm:$0xff]
    %v66 = vld [vmem:[%s0 + $0x68] sm:$0xff]
    %v67 = vld [vmem:[%s0 + $0x70] sm:$0xff]
    %v68 = vld [vmem:[%s0 + $0x78] sm:$0xff]
    %v69 = vld [vmem:[%s4] ss:$4 sm:$0x3]
    %s70 = scalar_lea.vmem %s4, 1
    %v71 = vld [vmem:[%s70] ss:$4 sm:$0x3]
    %s72 = scalar_lea.vmem %s4, 2
    %v73 = vld [vmem:[%s72] ss:$4 sm:$0x3]
    %s74 = scalar_lea.vmem %s4, 3
    %v75 = vld [vmem:[%s74] ss:$4 sm:$0x3]
    %v76 = vld [vmem:[%s1] sm:$0xff]
    %v77 = vld [vmem:[%s1 + $0x8] sm:$0xff]
    %v78 = vld [vmem:[%s1 + $0x10] sm:$0xff]
    %v79 = vld [vmem:[%s1 + $0x18] sm:$0xff]
    %v80 = vld [vmem:[%s1 + $0x20] sm:$0xff]
    %v81 = vld [vmem:[%s1 + $0x28] sm:$0xff]
    %v82 = vld [vmem:[%s1 + $0x30] sm:$0xff]
    %v83 = vld [vmem:[%s1 + $0x38] sm:$0xff]
    %v85 = vlaneseq
    %v86 = vshrl.u32 %v85, 7
    %v87 = vsub.s32 0, %v86
    %v88 = vrot.slane %v69, %v87
    %v89 = vlaneseq
    %v90 = vshrl.u32 %v89, 7
    %v91 = vsub.s32 1, %v90
    %v92 = vrot.slane %v69, %v91
    %vm95 = vcmask 261120
    %v97 = vsel %vm95, %v53, 0
    %v100 = vsel %vm95, %v54, 0
    %v103 = vsel %vm95, %v55, 0
    %v106 = vsel %vm95, %v56, 0
    %v109 = vsel %vm95, %v57, 0
    %v112 = vsel %vm95, %v58, 0
    %v115 = vsel %vm95, %v59, 0
    %v118 = vsel %vm95, %v60, 0
    %v121 = vsel %vm95, %v61, 0
    %v124 = vsel %vm95, %v62, 0
    %v127 = vsel %vm95, %v63, 0
    %v130 = vsel %vm95, %v64, 0
    %v133 = vsel %vm95, %v65, 0
    %v136 = vsel %vm95, %v66, 0
    %v139 = vsel %vm95, %v67, 0
    %v142 = vsel %vm95, %v68, 0
    %144 = vmatprep.subr.mxu0 0.0
    %145 = vmatpush1.msra.mxu0 0.0
    %146 = vmatprep.subr.mxu0 0.0
    %147 = vmatpush1.msra.mxu0 0.0
    %148 = vmatprep.subr.mxu0 0.0
    %149 = vmatpush1.msra.mxu0 0.0
    %150 = vmatprep.subr.mxu0 0.0
    %151 = vmatpush1.msra.mxu0 0.0
    %152 = vmatprep.subr.mxu0 0.0
    %153 = vmatpush1.msra.mxu0 0.0
    %154 = vmatprep.subr.mxu0 0.0
    %155 = vmatpush1.msra.mxu0 0.0
    %156 = vmatprep.subr.mxu0 0.0
    %157 = vmatpush1.msra.mxu0 0.0
    %158 = vmatprep.subr.mxu0 0.0
    %159 = vmatpush1.msra.mxu0 0.0
    %160 = vmatprep.subr.mxu0 0.0
    %161 = vmatpush1.msra.mxu0 0.0
    %162 = vmatprep.subr.mxu0 0.0
    %163 = vmatpush1.msra.mxu0 0.0
    %164 = vmatprep.subr.mxu0 0.0
    %165 = vmatpush1.msra.mxu0 0.0
    %166 = vmatprep.subr.mxu0 0.0
    %167 = vmatpush1.msra.mxu0 0.0
    %168 = vmatprep.subr.mxu0 %v83
    %169 = vmatpush1.msra.mxu0 %v82
    %170 = vmatprep.subr.mxu0 %v81
    %171 = vmatpush1.msra.mxu0 %v80
    %172 = vmatprep.subr.mxu0 %v79
    %173 = vmatpush1.msra.mxu0 %v78
    %174 = vmatprep.subr.mxu0 %v77
    %175 = vmatpush1.msra.mxu0 %v76
    %176 = vmatprep.subr.mxu0 0.0
    %177 = vmatpush2.msra.mxu0 0.0
    %178 = vmatprep.subr.mxu0 0.0
    %179 = vmatpush2.msra.mxu0 0.0
    %180 = vmatprep.subr.mxu0 0.0
    %181 = vmatpush2.msra.mxu0 0.0
    %182 = vmatprep.subr.mxu0 0.0
    %183 = vmatpush2.msra.mxu0 0.0
    %184 = vmatprep.subr.mxu0 0.0
    %185 = vmatpush2.msra.mxu0 0.0
    %186 = vmatprep.subr.mxu0 0.0
    %187 = vmatpush2.msra.mxu0 0.0
    %188 = vmatprep.subr.mxu0 0.0
    %189 = vmatpush2.msra.mxu0 0.0
    %190 = vmatprep.subr.mxu0 0.0
    %191 = vmatpush2.msra.mxu0 0.0
    %192 = vmatprep.subr.mxu0 0.0
    %193 = vmatpush2.msra.mxu0 0.0
    %194 = vmatprep.subr.mxu0 0.0
    %195 = vmatpush2.msra.mxu0 0.0
    %196 = vmatprep.subr.mxu0 0.0
    %197 = vmatpush2.msra.mxu0 0.0
    %198 = vmatprep.subr.mxu0 0.0
    %199 = vmatpush2.msra.mxu0 0.0
    %200 = vmatprep.subr.mxu0 0.0
    %201 = vmatpush2.msra.mxu0 0.0
    %202 = vmatprep.subr.mxu0 0.0
    %203 = vmatpush2.msra.mxu0 0.0
    %204 = vmatprep.subr.mxu0 0.0
    %205 = vmatpush2.msra.mxu0 0.0
    %206 = vmatprep.subr.mxu0 0.0
    %207 = vmatpush2.msra.mxu0 0.0
    %208 = vmatprep.mubr.f32.mxu0 0.0
    %209 = vmatmul.mubr.f32.gmra.mxu0 %v97
    %v210 = vpop.f32.mrf.mxu0
    %v211 = vadd.f32 %v88, %v210
    %v212 = vpop.f32.mrf.mxu0
    %v213 = vadd.f32 %v92, %v212
    %214 = vmatprep.mubr.f32.mxu0 0.0
    %215 = vmatmul.mubr.f32.gmra.mxu0 %v100
    %v216 = vpop.f32.mrf.mxu0
    %v217 = vadd.f32 %v88, %v216
    %v218 = vpop.f32.mrf.mxu0
    %v219 = vadd.f32 %v92, %v218
    %220 = vmatprep.mubr.f32.mxu0 0.0
    %221 = vmatmul.mubr.f32.gmra.mxu0 %v103
    %v222 = vpop.f32.mrf.mxu0
    %v223 = vadd.f32 %v88, %v222
    %v224 = vpop.f32.mrf.mxu0
    %v225 = vadd.f32 %v92, %v224
    %226 = vmatprep.mubr.f32.mxu0 0.0
    %227 = vmatmul.mubr.f32.gmra.mxu0 %v106
    %v228 = vpop.f32.mrf.mxu0
    %v229 = vadd.f32 %v88, %v228
    %v230 = vpop.f32.mrf.mxu0
    %v231 = vadd.f32 %v92, %v230
    %232 = vmatprep.mubr.f32.mxu0 0.0
    %233 = vmatmul.mubr.f32.gmra.mxu0 %v109
    %v234 = vpop.f32.mrf.mxu0
    %v235 = vadd.f32 %v88, %v234
    %v236 = vpop.f32.mrf.mxu0
    %v237 = vadd.f32 %v92, %v236
    %238 = vmatprep.mubr.f32.mxu0 0.0
    %239 = vmatmul.mubr.f32.gmra.mxu0 %v112
    %v240 = vpop.f32.mrf.mxu0
    %v241 = vadd.f32 %v88, %v240
    %v242 = vpop.f32.mrf.mxu0
    %v243 = vadd.f32 %v92, %v242
    %244 = vmatprep.mubr.f32.mxu0 0.0
    %245 = vmatmul.mubr.f32.gmra.mxu0 %v115
    %v246 = vpop.f32.mrf.mxu0
    %v247 = vadd.f32 %v88, %v246
    %v248 = vpop.f32.mrf.mxu0
    %v249 = vadd.f32 %v92, %v248
    %250 = vmatprep.mubr.f32.mxu0 0.0
    %251 = vmatmul.mubr.f32.gmra.mxu0 %v118
    %v252 = vpop.f32.mrf.mxu0
    %v253 = vadd.f32 %v88, %v252
    %v254 = vpop.f32.mrf.mxu0
    %v255 = vadd.f32 %v92, %v254
    %256 = vmatprep.mubr.f32.mxu0 0.0
    %257 = vmatmul.mubr.f32.gmra.mxu0 %v121
    %v258 = vpop.f32.mrf.mxu0
    %v259 = vadd.f32 %v88, %v258
    %v260 = vpop.f32.mrf.mxu0
    %v261 = vadd.f32 %v92, %v260
    %262 = vmatprep.mubr.f32.mxu0 0.0
    %263 = vmatmul.mubr.f32.gmra.mxu0 %v124
    %v264 = vpop.f32.mrf.mxu0
    %v265 = vadd.f32 %v88, %v264
    %v266 = vpop.f32.mrf.mxu0
    %v267 = vadd.f32 %v92, %v266
    %268 = vmatprep.mubr.f32.mxu0 0.0
    %269 = vmatmul.mubr.f32.gmra.mxu0 %v127
    %v270 = vpop.f32.mrf.mxu0
    %v271 = vadd.f32 %v88, %v270
    %v272 = vpop.f32.mrf.mxu0
    %v273 = vadd.f32 %v92, %v272
    %274 = vmatprep.mubr.f32.mxu0 0.0
    %275 = vmatmul.mubr.f32.gmra.mxu0 %v130
    %v276 = vpop.f32.mrf.mxu0
    %v277 = vadd.f32 %v88, %v276
    %v278 = vpop.f32.mrf.mxu0
    %v279 = vadd.f32 %v92, %v278
    %280 = vmatprep.mubr.f32.mxu0 0.0
    %281 = vmatmul.mubr.f32.gmra.mxu0 %v133
    %v282 = vpop.f32.mrf.mxu0
    %v283 = vadd.f32 %v88, %v282
    %v284 = vpop.f32.mrf.mxu0
    %v285 = vadd.f32 %v92, %v284
    %286 = vmatprep.mubr.f32.mxu0 0.0
    %287 = vmatmul.mubr.f32.gmra.mxu0 %v136
    %v288 = vpop.f32.mrf.mxu0
    %v289 = vadd.f32 %v88, %v288
    %v290 = vpop.f32.mrf.mxu0
    %v291 = vadd.f32 %v92, %v290
    %292 = vmatprep.mubr.f32.mxu0 0.0
    %293 = vmatmul.mubr.f32.gmra.mxu0 %v139
    %v294 = vpop.f32.mrf.mxu0
    %v295 = vadd.f32 %v88, %v294
    %v296 = vpop.f32.mrf.mxu0
    %v297 = vadd.f32 %v92, %v296
    %298 = vmatprep.mubr.f32.mxu0 0.0
    %299 = vmatmul.mubr.f32.gmra.mxu0 %v142
    %v300 = vpop.f32.mrf.mxu0
    %v301 = vadd.f32 %v88, %v300
    %v302 = vpop.f32.mrf.mxu0
    %v303 = vadd.f32 %v92, %v302
    %304 = vdwg.mxu0
    %v305 = vmax.f32 %v211, 0.0
    %v306 = vmax.f32 %v213, 0.0
    %v307 = vmax.f32 %v217, 0.0
    %v308 = vmax.f32 %v219, 0.0
    %v309 = vmax.f32 %v223, 0.0
    %v310 = vmax.f32 %v225, 0.0
    %v311 = vmax.f32 %v229, 0.0
    %v312 = vmax.f32 %v231, 0.0
    %v313 = vmax.f32 %v235, 0.0
    %v314 = vmax.f32 %v237, 0.0
    %v315 = vmax.f32 %v241, 0.0
    %v316 = vmax.f32 %v243, 0.0
    %v317 = vmax.f32 %v247, 0.0
    %v318 = vmax.f32 %v249, 0.0
    %v319 = vmax.f32 %v253, 0.0
    %v320 = vmax.f32 %v255, 0.0
    %v321 = vmax.f32 %v259, 0.0
    %v322 = vmax.f32 %v261, 0.0
    %v323 = vmax.f32 %v265, 0.0
    %v324 = vmax.f32 %v267, 0.0
    %v325 = vmax.f32 %v271, 0.0
    %v326 = vmax.f32 %v273, 0.0
    %v327 = vmax.f32 %v277, 0.0
    %v328 = vmax.f32 %v279, 0.0
    %v329 = vmax.f32 %v283, 0.0
    %v330 = vmax.f32 %v285, 0.0
    %v331 = vmax.f32 %v289, 0.0
    %v332 = vmax.f32 %v291, 0.0
    %v333 = vmax.f32 %v295, 0.0
    %v334 = vmax.f32 %v297, 0.0
    %v335 = vmax.f32 %v301, 0.0
    %v336 = vmax.f32 %v303, 0.0
    %v337 = vld [vmem:[#allocation3] sm:$0xff]
    %v338 = vld [vmem:[#allocation3 + $0x8] sm:$0xff]
    %v339 = vld [vmem:[#allocation3 + $0x10] sm:$0xff]
    %v340 = vld [vmem:[#allocation3 + $0x18] sm:$0xff]
    %v341 = vld [vmem:[#allocation3 + $0x20] sm:$0xff]
    %v342 = vld [vmem:[#allocation3 + $0x28] sm:$0xff]
    %v343 = vld [vmem:[#allocation3 + $0x30] sm:$0xff]
    %v344 = vld [vmem:[#allocation3 + $0x38] sm:$0xff]
    %v345 = vld [vmem:[#allocation3 + $0x40] sm:$0xff]
    %v346 = vld [vmem:[#allocation3 + $0x48] sm:$0xff]
    %v347 = vld [vmem:[#allocation3 + $0x50] sm:$0xff]
    %v348 = vld [vmem:[#allocation3 + $0x58] sm:$0xff]
    %v349 = vld [vmem:[#allocation3 + $0x60] sm:$0xff]
    %v350 = vld [vmem:[#allocation3 + $0x68] sm:$0xff]
    %v351 = vld [vmem:[#allocation3 + $0x70] sm:$0xff]
    %v352 = vld [vmem:[#allocation3 + $0x78] sm:$0xff]
    %v353 = vld [vmem:[#allocation3 + $0x80] sm:$0xff]
    %v354 = vld [vmem:[#allocation3 + $0x88] sm:$0xff]
    %v355 = vld [vmem:[#allocation3 + $0x90] sm:$0xff]
    %v356 = vld [vmem:[#allocation3 + $0x98] sm:$0xff]
    %v357 = vld [vmem:[#allocation3 + $0xa0] sm:$0xff]
    %v358 = vld [vmem:[#allocation3 + $0xa8] sm:$0xff]
    %v359 = vld [vmem:[#allocation3 + $0xb0] sm:$0xff]
    %v360 = vld [vmem:[#allocation3 + $0xb8] sm:$0xff]
    %v361 = vld [vmem:[#allocation3 + $0xc0] sm:$0xff]
    %v362 = vld [vmem:[#allocation3 + $0xc8] sm:$0xff]
    %v363 = vld [vmem:[#allocation3 + $0xd0] sm:$0xff]
    %v364 = vld [vmem:[#allocation3 + $0xd8] sm:$0xff]
    %v365 = vld [vmem:[#allocation3 + $0xe0] sm:$0xff]
    %v366 = vld [vmem:[#allocation3 + $0xe8] sm:$0xff]
    %v367 = vld [vmem:[#allocation3 + $0xf0] sm:$0xff]
    %v368 = vld [vmem:[#allocation3 + $0xf8] sm:$0xff]
    %v369 = vld [vmem:[#allocation3 + $0x100] sm:$0xff]
    %v370 = vld [vmem:[#allocation3 + $0x108] sm:$0xff]
    %v371 = vld [vmem:[#allocation3 + $0x110] sm:$0xff]
    %v372 = vld [vmem:[#allocation3 + $0x118] sm:$0xff]
    %v373 = vld [vmem:[#allocation3 + $0x120] sm:$0xff]
    %v374 = vld [vmem:[#allocation3 + $0x128] sm:$0xff]
    %v375 = vld [vmem:[#allocation3 + $0x130] sm:$0xff]
    %v376 = vld [vmem:[#allocation3 + $0x138] sm:$0xff]
    %v377 = vld [vmem:[#allocation3 + $0x140] sm:$0xff]
    %v378 = vld [vmem:[#allocation3 + $0x148] sm:$0xff]
    %v379 = vld [vmem:[#allocation3 + $0x150] sm:$0xff]
    %v380 = vld [vmem:[#allocation3 + $0x158] sm:$0xff]
    %v381 = vld [vmem:[#allocation3 + $0x160] sm:$0xff]
    %v382 = vld [vmem:[#allocation3 + $0x168] sm:$0xff]
    %v383 = vld [vmem:[#allocation3 + $0x170] sm:$0xff]
    %v384 = vld [vmem:[#allocation3 + $0x178] sm:$0xff]
    %v385 = vld [vmem:[#allocation3 + $0x180] sm:$0xff]
    %v386 = vld [vmem:[#allocation3 + $0x188] sm:$0xff]
    %v387 = vld [vmem:[#allocation3 + $0x190] sm:$0xff]
    %v388 = vld [vmem:[#allocation3 + $0x198] sm:$0xff]
    %v389 = vld [vmem:[#allocation3 + $0x1a0] sm:$0xff]
    %v390 = vld [vmem:[#allocation3 + $0x1a8] sm:$0xff]
    %v391 = vld [vmem:[#allocation3 + $0x1b0] sm:$0xff]
    %v392 = vld [vmem:[#allocation3 + $0x1b8] sm:$0xff]
    %v393 = vld [vmem:[#allocation3 + $0x1c0] sm:$0xff]
    %v394 = vld [vmem:[#allocation3 + $0x1c8] sm:$0xff]
    %v395 = vld [vmem:[#allocation3 + $0x1d0] sm:$0xff]
    %v396 = vld [vmem:[#allocation3 + $0x1d8] sm:$0xff]
    %v397 = vld [vmem:[#allocation3 + $0x1e0] sm:$0xff]
    %v398 = vld [vmem:[#allocation3 + $0x1e8] sm:$0xff]
    %v399 = vld [vmem:[#allocation3 + $0x1f0] sm:$0xff]
    %v400 = vld [vmem:[#allocation3 + $0x1f8] sm:$0xff]
    %v402 = vlaneseq
    %v403 = vshrl.u32 %v402, 7
    %v404 = vsub.s32 0, %v403
    %v405 = vrot.slane %v71, %v404
    %v406 = vlaneseq
    %v407 = vshrl.u32 %v406, 7
    %v408 = vsub.s32 1, %v407
    %v409 = vrot.slane %v71, %v408
    %412 = vmatprep.subr.mxu0 %v368
    %413 = vmatpush1.msra.mxu0 %v367
    %414 = vmatprep.subr.mxu0 %v366
    %415 = vmatpush1.msra.mxu0 %v365
    %416 = vmatprep.subr.mxu0 %v364
    %417 = vmatpush1.msra.mxu0 %v363
    %418 = vmatprep.subr.mxu0 %v362
    %419 = vmatpush1.msra.mxu0 %v361
    %420 = vmatprep.subr.mxu0 %v360
    %421 = vmatpush1.msra.mxu0 %v359
    %422 = vmatprep.subr.mxu0 %v358
    %423 = vmatpush1.msra.mxu0 %v357
    %424 = vmatprep.subr.mxu0 %v356
    %425 = vmatpush1.msra.mxu0 %v355
    %426 = vmatprep.subr.mxu0 %v354
    %427 = vmatpush1.msra.mxu0 %v353
    %428 = vmatprep.subr.mxu0 %v352
    %429 = vmatpush1.msra.mxu0 %v351
    %430 = vmatprep.subr.mxu0 %v350
    %431 = vmatpush1.msra.mxu0 %v349
    %432 = vmatprep.subr.mxu0 %v348
    %433 = vmatpush1.msra.mxu0 %v347
    %434 = vmatprep.subr.mxu0 %v346
    %435 = vmatpush1.msra.mxu0 %v345
    %436 = vmatprep.subr.mxu0 %v344
    %437 = vmatpush1.msra.mxu0 %v343
    %438 = vmatprep.subr.mxu0 %v342
    %439 = vmatpush1.msra.mxu0 %v341
    %440 = vmatprep.subr.mxu0 %v340
    %441 = vmatpush1.msra.mxu0 %v339
    %442 = vmatprep.subr.mxu0 %v338
    %443 = vmatpush1.msra.mxu0 %v337
    %444 = vmatprep.subr.mxu0 %v400
    %445 = vmatpush2.msra.mxu0 %v399
    %446 = vmatprep.subr.mxu0 %v398
    %447 = vmatpush2.msra.mxu0 %v397
    %448 = vmatprep.subr.mxu0 %v396
    %449 = vmatpush2.msra.mxu0 %v395
    %450 = vmatprep.subr.mxu0 %v394
    %451 = vmatpush2.msra.mxu0 %v393
    %452 = vmatprep.subr.mxu0 %v392
    %453 = vmatpush2.msra.mxu0 %v391
    %454 = vmatprep.subr.mxu0 %v390
    %455 = vmatpush2.msra.mxu0 %v389
    %456 = vmatprep.subr.mxu0 %v388
    %457 = vmatpush2.msra.mxu0 %v387
    %458 = vmatprep.subr.mxu0 %v386
    %459 = vmatpush2.msra.mxu0 %v385
    %460 = vmatprep.subr.mxu0 %v384
    %461 = vmatpush2.msra.mxu0 %v383
    %462 = vmatprep.subr.mxu0 %v382
    %463 = vmatpush2.msra.mxu0 %v381
    %464 = vmatprep.subr.mxu0 %v380
    %465 = vmatpush2.msra.mxu0 %v379
    %466 = vmatprep.subr.mxu0 %v378
    %467 = vmatpush2.msra.mxu0 %v377
    %468 = vmatprep.subr.mxu0 %v376
    %469 = vmatpush2.msra.mxu0 %v375
    %470 = vmatprep.subr.mxu0 %v374
    %471 = vmatpush2.msra.mxu0 %v373
    %472 = vmatprep.subr.mxu0 %v372
    %473 = vmatpush2.msra.mxu0 %v371
    %474 = vmatprep.subr.mxu0 %v370
    %475 = vmatpush2.msra.mxu0 %v369
    %476 = vmatprep.mubr.f32.mxu0 %v306
    %477 = vmatmul.mubr.f32.gmra.mxu0 %v305
    %v478 = vpop.f32.mrf.mxu0
    %v479 = vadd.f32 %v405, %v478
    %v480 = vpop.f32.mrf.mxu0
    %v481 = vadd.f32 %v409, %v480
    %482 = vmatprep.mubr.f32.mxu0 %v308
    %483 = vmatmul.mubr.f32.gmra.mxu0 %v307
    %v484 = vpop.f32.mrf.mxu0
    %v485 = vadd.f32 %v405, %v484
    %v486 = vpop.f32.mrf.mxu0
    %v487 = vadd.f32 %v409, %v486
    %488 = vmatprep.mubr.f32.mxu0 %v310
    %489 = vmatmul.mubr.f32.gmra.mxu0 %v309
    %v490 = vpop.f32.mrf.mxu0
    %v491 = vadd.f32 %v405, %v490
    %v492 = vpop.f32.mrf.mxu0
    %v493 = vadd.f32 %v409, %v492
    %494 = vmatprep.mubr.f32.mxu0 %v312
    %495 = vmatmul.mubr.f32.gmra.mxu0 %v311
    %v496 = vpop.f32.mrf.mxu0
    %v497 = vadd.f32 %v405, %v496
    %v498 = vpop.f32.mrf.mxu0
    %v499 = vadd.f32 %v409, %v498
    %500 = vmatprep.mubr.f32.mxu0 %v314
    %501 = vmatmul.mubr.f32.gmra.mxu0 %v313
    %v502 = vpop.f32.mrf.mxu0
    %v503 = vadd.f32 %v405, %v502
    %v504 = vpop.f32.mrf.mxu0
    %v505 = vadd.f32 %v409, %v504
    %506 = vmatprep.mubr.f32.mxu0 %v316
    %507 = vmatmul.mubr.f32.gmra.mxu0 %v315
    %v508 = vpop.f32.mrf.mxu0
    %v509 = vadd.f32 %v405, %v508
    %v510 = vpop.f32.mrf.mxu0
    %v511 = vadd.f32 %v409, %v510
    %512 = vmatprep.mubr.f32.mxu0 %v318
    %513 = vmatmul.mubr.f32.gmra.mxu0 %v317
    %v514 = vpop.f32.mrf.mxu0
    %v515 = vadd.f32 %v405, %v514
    %v516 = vpop.f32.mrf.mxu0
    %v517 = vadd.f32 %v409, %v516
    %518 = vmatprep.mubr.f32.mxu0 %v320
    %519 = vmatmul.mubr.f32.gmra.mxu0 %v319
    %v520 = vpop.f32.mrf.mxu0
    %v521 = vadd.f32 %v405, %v520
    %v522 = vpop.f32.mrf.mxu0
    %v523 = vadd.f32 %v409, %v522
    %524 = vmatprep.mubr.f32.mxu0 %v322
    %525 = vmatmul.mubr.f32.gmra.mxu0 %v321
    %v526 = vpop.f32.mrf.mxu0
    %v527 = vadd.f32 %v405, %v526
    %v528 = vpop.f32.mrf.mxu0
    %v529 = vadd.f32 %v409, %v528
    %530 = vmatprep.mubr.f32.mxu0 %v324
    %531 = vmatmul.mubr.f32.gmra.mxu0 %v323
    %v532 = vpop.f32.mrf.mxu0
    %v533 = vadd.f32 %v405, %v532
    %v534 = vpop.f32.mrf.mxu0
    %v535 = vadd.f32 %v409, %v534
    %536 = vmatprep.mubr.f32.mxu0 %v326
    %537 = vmatmul.mubr.f32.gmra.mxu0 %v325
    %v538 = vpop.f32.mrf.mxu0
    %v539 = vadd.f32 %v405, %v538
    %v540 = vpop.f32.mrf.mxu0
    %v541 = vadd.f32 %v409, %v540
    %542 = vmatprep.mubr.f32.mxu0 %v328
    %543 = vmatmul.mubr.f32.gmra.mxu0 %v327
    %v544 = vpop.f32.mrf.mxu0
    %v545 = vadd.f32 %v405, %v544
    %v546 = vpop.f32.mrf.mxu0
    %v547 = vadd.f32 %v409, %v546
    %548 = vmatprep.mubr.f32.mxu0 %v330
    %549 = vmatmul.mubr.f32.gmra.mxu0 %v329
    %v550 = vpop.f32.mrf.mxu0
    %v551 = vadd.f32 %v405, %v550
    %v552 = vpop.f32.mrf.mxu0
    %v553 = vadd.f32 %v409, %v552
    %554 = vmatprep.mubr.f32.mxu0 %v332
    %555 = vmatmul.mubr.f32.gmra.mxu0 %v331
    %v556 = vpop.f32.mrf.mxu0
    %v557 = vadd.f32 %v405, %v556
    %v558 = vpop.f32.mrf.mxu0
    %v559 = vadd.f32 %v409, %v558
    %560 = vmatprep.mubr.f32.mxu0 %v334
    %561 = vmatmul.mubr.f32.gmra.mxu0 %v333
    %v562 = vpop.f32.mrf.mxu0
    %v563 = vadd.f32 %v405, %v562
    %v564 = vpop.f32.mrf.mxu0
    %v565 = vadd.f32 %v409, %v564
    %566 = vmatprep.mubr.f32.mxu0 %v336
    %567 = vmatmul.mubr.f32.gmra.mxu0 %v335
    %v568 = vpop.f32.mrf.mxu0
    %v569 = vadd.f32 %v405, %v568
    %v570 = vpop.f32.mrf.mxu0
    %v571 = vadd.f32 %v409, %v570
    %572 = vdwg.mxu0
    %v573 = vmax.f32 %v479, 0.0
    %v574 = vmax.f32 %v481, 0.0
    %v575 = vmax.f32 %v485, 0.0
    %v576 = vmax.f32 %v487, 0.0
    %v577 = vmax.f32 %v491, 0.0
    %v578 = vmax.f32 %v493, 0.0
    %v579 = vmax.f32 %v497, 0.0
    %v580 = vmax.f32 %v499, 0.0
    %v581 = vmax.f32 %v503, 0.0
    %v582 = vmax.f32 %v505, 0.0
    %v583 = vmax.f32 %v509, 0.0
    %v584 = vmax.f32 %v511, 0.0
    %v585 = vmax.f32 %v515, 0.0
    %v586 = vmax.f32 %v517, 0.0
    %v587 = vmax.f32 %v521, 0.0
    %v588 = vmax.f32 %v523, 0.0
    %v589 = vmax.f32 %v527, 0.0
    %v590 = vmax.f32 %v529, 0.0
    %v591 = vmax.f32 %v533, 0.0
    %v592 = vmax.f32 %v535, 0.0
    %v593 = vmax.f32 %v539, 0.0
    %v594 = vmax.f32 %v541, 0.0
    %v595 = vmax.f32 %v545, 0.0
    %v596 = vmax.f32 %v547, 0.0
    %v597 = vmax.f32 %v551, 0.0
    %v598 = vmax.f32 %v553, 0.0
    %v599 = vmax.f32 %v557, 0.0
    %v600 = vmax.f32 %v559, 0.0
    %v601 = vmax.f32 %v563, 0.0
    %v602 = vmax.f32 %v565, 0.0
    %v603 = vmax.f32 %v569, 0.0
    %v604 = vmax.f32 %v571, 0.0
    %v605 = vld [vmem:[#allocation6] sm:$0xff]
    %v606 = vld [vmem:[#allocation6 + $0x8] sm:$0xff]
    %v607 = vld [vmem:[#allocation6 + $0x10] sm:$0xff]
    %v608 = vld [vmem:[#allocation6 + $0x18] sm:$0xff]
    %v609 = vld [vmem:[#allocation6 + $0x20] sm:$0xff]
    %v610 = vld [vmem:[#allocation6 + $0x28] sm:$0xff]
    %v611 = vld [vmem:[#allocation6 + $0x30] sm:$0xff]
    %v612 = vld [vmem:[#allocation6 + $0x38] sm:$0xff]
    %v613 = vld [vmem:[#allocation6 + $0x40] sm:$0xff]
    %v614 = vld [vmem:[#allocation6 + $0x48] sm:$0xff]
    %v615 = vld [vmem:[#allocation6 + $0x50] sm:$0xff]
    %v616 = vld [vmem:[#allocation6 + $0x58] sm:$0xff]
    %v617 = vld [vmem:[#allocation6 + $0x60] sm:$0xff]
    %v618 = vld [vmem:[#allocation6 + $0x68] sm:$0xff]
    %v619 = vld [vmem:[#allocation6 + $0x70] sm:$0xff]
    %v620 = vld [vmem:[#allocation6 + $0x78] sm:$0xff]
    %v621 = vld [vmem:[#allocation6 + $0x80] sm:$0xff]
    %v622 = vld [vmem:[#allocation6 + $0x88] sm:$0xff]
    %v623 = vld [vmem:[#allocation6 + $0x90] sm:$0xff]
    %v624 = vld [vmem:[#allocation6 + $0x98] sm:$0xff]
    %v625 = vld [vmem:[#allocation6 + $0xa0] sm:$0xff]
    %v626 = vld [vmem:[#allocation6 + $0xa8] sm:$0xff]
    %v627 = vld [vmem:[#allocation6 + $0xb0] sm:$0xff]
    %v628 = vld [vmem:[#allocation6 + $0xb8] sm:$0xff]
    %v629 = vld [vmem:[#allocation6 + $0xc0] sm:$0xff]
    %v630 = vld [vmem:[#allocation6 + $0xc8] sm:$0xff]
    %v631 = vld [vmem:[#allocation6 + $0xd0] sm:$0xff]
    %v632 = vld [vmem:[#allocation6 + $0xd8] sm:$0xff]
    %v633 = vld [vmem:[#allocation6 + $0xe0] sm:$0xff]
    %v634 = vld [vmem:[#allocation6 + $0xe8] sm:$0xff]
    %v635 = vld [vmem:[#allocation6 + $0xf0] sm:$0xff]
    %v636 = vld [vmem:[#allocation6 + $0xf8] sm:$0xff]
    %v637 = vld [vmem:[#allocation6 + $0x100] sm:$0xff]
    %v638 = vld [vmem:[#allocation6 + $0x108] sm:$0xff]
    %v639 = vld [vmem:[#allocation6 + $0x110] sm:$0xff]
    %v640 = vld [vmem:[#allocation6 + $0x118] sm:$0xff]
    %v641 = vld [vmem:[#allocation6 + $0x120] sm:$0xff]
    %v642 = vld [vmem:[#allocation6 + $0x128] sm:$0xff]
    %v643 = vld [vmem:[#allocation6 + $0x130] sm:$0xff]
    %v644 = vld [vmem:[#allocation6 + $0x138] sm:$0xff]
    %v645 = vld [vmem:[#allocation6 + $0x140] sm:$0xff]
    %v646 = vld [vmem:[#allocation6 + $0x148] sm:$0xff]
    %v647 = vld [vmem:[#allocation6 + $0x150] sm:$0xff]
    %v648 = vld [vmem:[#allocation6 + $0x158] sm:$0xff]
    %v649 = vld [vmem:[#allocation6 + $0x160] sm:$0xff]
    %v650 = vld [vmem:[#allocation6 + $0x168] sm:$0xff]
    %v651 = vld [vmem:[#allocation6 + $0x170] sm:$0xff]
    %v652 = vld [vmem:[#allocation6 + $0x178] sm:$0xff]
    %v653 = vld [vmem:[#allocation6 + $0x180] sm:$0xff]
    %v654 = vld [vmem:[#allocation6 + $0x188] sm:$0xff]
    %v655 = vld [vmem:[#allocation6 + $0x190] sm:$0xff]
    %v656 = vld [vmem:[#allocation6 + $0x198] sm:$0xff]
    %v657 = vld [vmem:[#allocation6 + $0x1a0] sm:$0xff]
    %v658 = vld [vmem:[#allocation6 + $0x1a8] sm:$0xff]
    %v659 = vld [vmem:[#allocation6 + $0x1b0] sm:$0xff]
    %v660 = vld [vmem:[#allocation6 + $0x1b8] sm:$0xff]
    %v661 = vld [vmem:[#allocation6 + $0x1c0] sm:$0xff]
    %v662 = vld [vmem:[#allocation6 + $0x1c8] sm:$0xff]
    %v663 = vld [vmem:[#allocation6 + $0x1d0] sm:$0xff]
    %v664 = vld [vmem:[#allocation6 + $0x1d8] sm:$0xff]
    %v665 = vld [vmem:[#allocation6 + $0x1e0] sm:$0xff]
    %v666 = vld [vmem:[#allocation6 + $0x1e8] sm:$0xff]
    %v667 = vld [vmem:[#allocation6 + $0x1f0] sm:$0xff]
    %v668 = vld [vmem:[#allocation6 + $0x1f8] sm:$0xff]
    %v670 = vlaneseq
    %v671 = vshrl.u32 %v670, 7
    %v672 = vsub.s32 0, %v671
    %v673 = vrot.slane %v73, %v672
    %v674 = vlaneseq
    %v675 = vshrl.u32 %v674, 7
    %v676 = vsub.s32 1, %v675
    %v677 = vrot.slane %v73, %v676
    %680 = vmatprep.subr.mxu0 %v636
    %681 = vmatpush1.msra.mxu0 %v635
    %682 = vmatprep.subr.mxu0 %v634
    %683 = vmatpush1.msra.mxu0 %v633
    %684 = vmatprep.subr.mxu0 %v632
    %685 = vmatpush1.msra.mxu0 %v631
    %686 = vmatprep.subr.mxu0 %v630
    %687 = vmatpush1.msra.mxu0 %v629
    %688 = vmatprep.subr.mxu0 %v628
    %689 = vmatpush1.msra.mxu0 %v627
    %690 = vmatprep.subr.mxu0 %v626
    %691 = vmatpush1.msra.mxu0 %v625
    %692 = vmatprep.subr.mxu0 %v624
    %693 = vmatpush1.msra.mxu0 %v623
    %694 = vmatprep.subr.mxu0 %v622
    %695 = vmatpush1.msra.mxu0 %v621
    %696 = vmatprep.subr.mxu0 %v620
    %697 = vmatpush1.msra.mxu0 %v619
    %698 = vmatprep.subr.mxu0 %v618
    %699 = vmatpush1.msra.mxu0 %v617
    %700 = vmatprep.subr.mxu0 %v616
    %701 = vmatpush1.msra.mxu0 %v615
    %702 = vmatprep.subr.mxu0 %v614
    %703 = vmatpush1.msra.mxu0 %v613
    %704 = vmatprep.subr.mxu0 %v612
    %705 = vmatpush1.msra.mxu0 %v611
    %706 = vmatprep.subr.mxu0 %v610
    %707 = vmatpush1.msra.mxu0 %v609
    %708 = vmatprep.subr.mxu0 %v608
    %709 = vmatpush1.msra.mxu0 %v607
    %710 = vmatprep.subr.mxu0 %v606
    %711 = vmatpush1.msra.mxu0 %v605
    %712 = vmatprep.subr.mxu0 %v668
    %713 = vmatpush2.msra.mxu0 %v667
    %714 = vmatprep.subr.mxu0 %v666
    %715 = vmatpush2.msra.mxu0 %v665
    %716 = vmatprep.subr.mxu0 %v664
    %717 = vmatpush2.msra.mxu0 %v663
    %718 = vmatprep.subr.mxu0 %v662
    %719 = vmatpush2.msra.mxu0 %v661
    %720 = vmatprep.subr.mxu0 %v660
    %721 = vmatpush2.msra.mxu0 %v659
    %722 = vmatprep.subr.mxu0 %v658
    %723 = vmatpush2.msra.mxu0 %v657
    %724 = vmatprep.subr.mxu0 %v656
    %725 = vmatpush2.msra.mxu0 %v655
    %726 = vmatprep.subr.mxu0 %v654
    %727 = vmatpush2.msra.mxu0 %v653
    %728 = vmatprep.subr.mxu0 %v652
    %729 = vmatpush2.msra.mxu0 %v651
    %730 = vmatprep.subr.mxu0 %v650
    %731 = vmatpush2.msra.mxu0 %v649
    %732 = vmatprep.subr.mxu0 %v648
    %733 = vmatpush2.msra.mxu0 %v647
    %734 = vmatprep.subr.mxu0 %v646
    %735 = vmatpush2.msra.mxu0 %v645
    %736 = vmatprep.subr.mxu0 %v644
    %737 = vmatpush2.msra.mxu0 %v643
    %738 = vmatprep.subr.mxu0 %v642
    %739 = vmatpush2.msra.mxu0 %v641
    %740 = vmatprep.subr.mxu0 %v640
    %741 = vmatpush2.msra.mxu0 %v639
    %742 = vmatprep.subr.mxu0 %v638
    %743 = vmatpush2.msra.mxu0 %v637
    %744 = vmatprep.mubr.f32.mxu0 %v574
    %745 = vmatmul.mubr.f32.gmra.mxu0 %v573
    %v746 = vpop.f32.mrf.mxu0
    %v747 = vadd.f32 %v673, %v746
    %v748 = vpop.f32.mrf.mxu0
    %v749 = vadd.f32 %v677, %v748
    %750 = vmatprep.mubr.f32.mxu0 %v576
    %751 = vmatmul.mubr.f32.gmra.mxu0 %v575
    %v752 = vpop.f32.mrf.mxu0
    %v753 = vadd.f32 %v673, %v752
    %v754 = vpop.f32.mrf.mxu0
    %v755 = vadd.f32 %v677, %v754
    %756 = vmatprep.mubr.f32.mxu0 %v578
    %757 = vmatmul.mubr.f32.gmra.mxu0 %v577
    %v758 = vpop.f32.mrf.mxu0
    %v759 = vadd.f32 %v673, %v758
    %v760 = vpop.f32.mrf.mxu0
    %v761 = vadd.f32 %v677, %v760
    %762 = vmatprep.mubr.f32.mxu0 %v580
    %763 = vmatmul.mubr.f32.gmra.mxu0 %v579
    %v764 = vpop.f32.mrf.mxu0
    %v765 = vadd.f32 %v673, %v764
    %v766 = vpop.f32.mrf.mxu0
    %v767 = vadd.f32 %v677, %v766
    %768 = vmatprep.mubr.f32.mxu0 %v582
    %769 = vmatmul.mubr.f32.gmra.mxu0 %v581
    %v770 = vpop.f32.mrf.mxu0
    %v771 = vadd.f32 %v673, %v770
    %v772 = vpop.f32.mrf.mxu0
    %v773 = vadd.f32 %v677, %v772
    %774 = vmatprep.mubr.f32.mxu0 %v584
    %775 = vmatmul.mubr.f32.gmra.mxu0 %v583
    %v776 = vpop.f32.mrf.mxu0
    %v777 = vadd.f32 %v673, %v776
    %v778 = vpop.f32.mrf.mxu0
    %v779 = vadd.f32 %v677, %v778
    %780 = vmatprep.mubr.f32.mxu0 %v586
    %781 = vmatmul.mubr.f32.gmra.mxu0 %v585
    %v782 = vpop.f32.mrf.mxu0
    %v783 = vadd.f32 %v673, %v782
    %v784 = vpop.f32.mrf.mxu0
    %v785 = vadd.f32 %v677, %v784
    %786 = vmatprep.mubr.f32.mxu0 %v588
    %787 = vmatmul.mubr.f32.gmra.mxu0 %v587
    %v788 = vpop.f32.mrf.mxu0
    %v789 = vadd.f32 %v673, %v788
    %v790 = vpop.f32.mrf.mxu0
    %v791 = vadd.f32 %v677, %v790
    %792 = vmatprep.mubr.f32.mxu0 %v590
    %793 = vmatmul.mubr.f32.gmra.mxu0 %v589
    %v794 = vpop.f32.mrf.mxu0
    %v795 = vadd.f32 %v673, %v794
    %v796 = vpop.f32.mrf.mxu0
    %v797 = vadd.f32 %v677, %v796
    %798 = vmatprep.mubr.f32.mxu0 %v592
    %799 = vmatmul.mubr.f32.gmra.mxu0 %v591
    %v800 = vpop.f32.mrf.mxu0
    %v801 = vadd.f32 %v673, %v800
    %v802 = vpop.f32.mrf.mxu0
    %v803 = vadd.f32 %v677, %v802
    %804 = vmatprep.mubr.f32.mxu0 %v594
    %805 = vmatmul.mubr.f32.gmra.mxu0 %v593
    %v806 = vpop.f32.mrf.mxu0
    %v807 = vadd.f32 %v673, %v806
    %v808 = vpop.f32.mrf.mxu0
    %v809 = vadd.f32 %v677, %v808
    %810 = vmatprep.mubr.f32.mxu0 %v596
    %811 = vmatmul.mubr.f32.gmra.mxu0 %v595
    %v812 = vpop.f32.mrf.mxu0
    %v813 = vadd.f32 %v673, %v812
    %v814 = vpop.f32.mrf.mxu0
    %v815 = vadd.f32 %v677, %v814
    %816 = vmatprep.mubr.f32.mxu0 %v598
    %817 = vmatmul.mubr.f32.gmra.mxu0 %v597
    %v818 = vpop.f32.mrf.mxu0
    %v819 = vadd.f32 %v673, %v818
    %v820 = vpop.f32.mrf.mxu0
    %v821 = vadd.f32 %v677, %v820
    %822 = vmatprep.mubr.f32.mxu0 %v600
    %823 = vmatmul.mubr.f32.gmra.mxu0 %v599
    %v824 = vpop.f32.mrf.mxu0
    %v825 = vadd.f32 %v673, %v824
    %v826 = vpop.f32.mrf.mxu0
    %v827 = vadd.f32 %v677, %v826
    %828 = vmatprep.mubr.f32.mxu0 %v602
    %829 = vmatmul.mubr.f32.gmra.mxu0 %v601
    %v830 = vpop.f32.mrf.mxu0
    %v831 = vadd.f32 %v673, %v830
    %v832 = vpop.f32.mrf.mxu0
    %v833 = vadd.f32 %v677, %v832
    %834 = vmatprep.mubr.f32.mxu0 %v604
    %835 = vmatmul.mubr.f32.gmra.mxu0 %v603
    %v836 = vpop.f32.mrf.mxu0
    %v837 = vadd.f32 %v673, %v836
    %v838 = vpop.f32.mrf.mxu0
    %v839 = vadd.f32 %v677, %v838
    %840 = vdwg.mxu0
    %v841 = vmax.f32 %v747, 0.0
    %v842 = vmax.f32 %v749, 0.0
    %v843 = vmax.f32 %v753, 0.0
    %v844 = vmax.f32 %v755, 0.0
    %v845 = vmax.f32 %v759, 0.0
    %v846 = vmax.f32 %v761, 0.0
    %v847 = vmax.f32 %v765, 0.0
    %v848 = vmax.f32 %v767, 0.0
    %v849 = vmax.f32 %v771, 0.0
    %v850 = vmax.f32 %v773, 0.0
    %v851 = vmax.f32 %v777, 0.0
    %v852 = vmax.f32 %v779, 0.0
    %v853 = vmax.f32 %v783, 0.0
    %v854 = vmax.f32 %v785, 0.0
    %v855 = vmax.f32 %v789, 0.0
    %v856 = vmax.f32 %v791, 0.0
    %v857 = vmax.f32 %v795, 0.0
    %v858 = vmax.f32 %v797, 0.0
    %v859 = vmax.f32 %v801, 0.0
    %v860 = vmax.f32 %v803, 0.0
    %v861 = vmax.f32 %v807, 0.0
    %v862 = vmax.f32 %v809, 0.0
    %v863 = vmax.f32 %v813, 0.0
    %v864 = vmax.f32 %v815, 0.0
    %v865 = vmax.f32 %v819, 0.0
    %v866 = vmax.f32 %v821, 0.0
    %v867 = vmax.f32 %v825, 0.0
    %v868 = vmax.f32 %v827, 0.0
    %v869 = vmax.f32 %v831, 0.0
    %v870 = vmax.f32 %v833, 0.0
    %v871 = vmax.f32 %v837, 0.0
    %v872 = vmax.f32 %v839, 0.0
    %s873 = sld [smem:[#allocation2]]
    %v874 = vstv %s873
    %v876 = vlaneseq
    %v877 = vshrl.u32 %v876, 7
    %v878 = vsub.s32 0, %v877
    %v879 = vrot.slane %v75, %v878
    %v880 = vlaneseq
    %v881 = vshrl.u32 %v880, 7
    %v882 = vsub.s32 1, %v881
    %v883 = vrot.slane %v75, %v882
    %886 = vmatprep.subr.mxu0 %v872
    %887 = vmatpush1.xpose.msra.mxu0 %v871
    %888 = vmatprep.subr.mxu0 %v870
    %889 = vmatpush1.xpose.msra.mxu0 %v869
    %890 = vmatprep.subr.mxu0 %v868
    %891 = vmatpush1.xpose.msra.mxu0 %v867
    %892 = vmatprep.subr.mxu0 %v866
    %893 = vmatpush1.xpose.msra.mxu0 %v865
    %894 = vmatprep.subr.mxu0 %v864
    %895 = vmatpush1.xpose.msra.mxu0 %v863
    %896 = vmatprep.subr.mxu0 %v862
    %897 = vmatpush1.xpose.msra.mxu0 %v861
    %898 = vmatprep.subr.mxu0 %v860
    %899 = vmatpush1.xpose.msra.mxu0 %v859
    %900 = vmatprep.subr.mxu0 %v858
    %901 = vmatpush1.xpose.msra.mxu0 %v857
    %902 = vmatprep.subr.mxu0 %v856
    %903 = vmatpush1.xpose.msra.mxu0 %v855
    %904 = vmatprep.subr.mxu0 %v854
    %905 = vmatpush1.xpose.msra.mxu0 %v853
    %906 = vmatprep.subr.mxu0 %v852
    %907 = vmatpush1.xpose.msra.mxu0 %v851
    %908 = vmatprep.subr.mxu0 %v850
    %909 = vmatpush1.xpose.msra.mxu0 %v849
    %910 = vmatprep.subr.mxu0 %v848
    %911 = vmatpush1.xpose.msra.mxu0 %v847
    %912 = vmatprep.subr.mxu0 %v846
    %913 = vmatpush1.xpose.msra.mxu0 %v845
    %914 = vmatprep.subr.mxu0 %v844
    %915 = vmatpush1.xpose.msra.mxu0 %v843
    %916 = vmatprep.subr.mxu0 %v842
    %917 = vmatpush1.xpose.msra.mxu0 %v841
    %918 = vmatprep.subr.mxu0 0.0
    %919 = vmatpush2.xpose.msra.mxu0 0.0
    %920 = vmatprep.subr.mxu0 0.0
    %921 = vmatpush2.xpose.msra.mxu0 0.0
    %922 = vmatprep.subr.mxu0 0.0
    %923 = vmatpush2.xpose.msra.mxu0 0.0
    %924 = vmatprep.subr.mxu0 0.0
    %925 = vmatpush2.xpose.msra.mxu0 0.0
    %926 = vmatprep.subr.mxu0 0.0
    %927 = vmatpush2.xpose.msra.mxu0 0.0
    %928 = vmatprep.subr.mxu0 0.0
    %929 = vmatpush2.xpose.msra.mxu0 0.0
    %930 = vmatprep.subr.mxu0 0.0
    %931 = vmatpush2.xpose.msra.mxu0 0.0
    %932 = vmatprep.subr.mxu0 0.0
    %933 = vmatpush2.xpose.msra.mxu0 0.0
    %934 = vmatprep.subr.mxu0 0.0
    %935 = vmatpush2.xpose.msra.mxu0 0.0
    %936 = vmatprep.subr.mxu0 0.0
    %937 = vmatpush2.xpose.msra.mxu0 0.0
    %938 = vmatprep.subr.mxu0 0.0
    %939 = vmatpush2.xpose.msra.mxu0 0.0
    %940 = vmatprep.subr.mxu0 0.0
    %941 = vmatpush2.xpose.msra.mxu0 0.0
    %942 = vmatprep.subr.mxu0 0.0
    %943 = vmatpush2.xpose.msra.mxu0 0.0
    %944 = vmatprep.subr.mxu0 0.0
    %945 = vmatpush2.xpose.msra.mxu0 0.0
    %946 = vmatprep.subr.mxu0 0.0
    %947 = vmatpush2.xpose.msra.mxu0 0.0
    %948 = vmatprep.subr.mxu0 0.0
    %949 = vmatpush2.xpose.msra.mxu0 0.0
    %950 = vmatprep.mubr.f32.mxu0 %v883
    %951 = vmatmul.mubr.f32.gmra.mxu0 %v879
    %v952 = vpop.f32.mrf.mxu0
    %v953 = vadd.f32 %v874, %v952
    %v954 = vpop.f32.mrf.mxu0
    %955 = vdwg.mxu0
    %956 = vst [vmem:[#allocation8] sm:$0x1] %v953
    // Predicated region
    $region34: #{tpu_custom_call.1} parent=1 // pred_check
      _
    $region35: #{tpu_custom_call.1} parent=1 // pred_check_branch
      %958 = sbr.rel (0) target = $region37
    $region36: #{tpu_custom_call.1} parent=1 // pred_region
      %s960 = ssub.s32 16, 16
      %961 = vsyncadd [#allocation5], %s960
      %s963 = sshll.u32 [#allocation8], 4
      %s964 = int_to_ptr.vmem [resolvable:$true] %s963
      %966 = dma.vmem_to_hbm [thread:$0]  %s964, 16, %s6, [#allocation5]
    $region37: #{tpu_custom_call.1} parent=1 // pred_fallthru
      _
    // Predicated region
    $region38: #{tpu_custom_call.1} parent=1 // pred_check
      _
    $region39: #{tpu_custom_call.1} parent=1 // pred_check_branch
      %968 = sbr.rel (0) target = $region41
    $region40: #{tpu_custom_call.1} parent=1 // pred_region
      %969 = dma.done [#allocation5], 16
    $region41: #{tpu_custom_call.1} parent=1 // pred_fallthru
      _
    %970 = vsyncpa [#allocation4], 1
    %971 = vsyncpa [#allocation7], 1
    %972 = vsyncpa [#allocation5], 1

</llo_original>
